<compile_context>
chip_gen: v5e
topology: v5e:2x2
jax: 0.10.0
libtpu: 0.0.40
codegen_flags: <defaults>
</compile_context>

<pallas_src>
import jax
import jax.numpy as jnp
from jax import lax
from jax.experimental import pallas as pl
from jax.experimental.pallas import tpu as pltpu


def _round_up(x, m):
    return ((x + m - 1) // m) * m


def critic_kernel(s_ref, a_ref, w1s_ref, w1a_ref, b1_ref, w2_ref, b2_ref,
                  w3t_ref, b3_ref, o_ref):
    # Hoist parameter loads once per grid step.
    w1s = w1s_ref[...]          # (sd, 16)  compute dtype
    w1a = w1a_ref[...]          # (ad, 16)  compute dtype
    b1 = b1_ref[...]            # (1, 16)   f32
    w2 = w2_ref[...]            # (16, 16)  compute dtype
    b2 = b2_ref[...]            # (1, 16)   f32
    w3t = w3t_ref[...]          # (1, 16)   compute dtype (fc3 weight, transposed)
    b3 = b3_ref[...]            # (1, 1)    f32

    s = s_ref[...]              # (TILE_B, sd)
    a = a_ref[...]              # (TILE_B, ad)

    # fc1: concat folded into two MXU passes; f32 accumulation, f32 ReLU.
    h1 = (jnp.dot(s, w1s, preferred_element_type=jnp.float32)
          + jnp.dot(a, w1a, preferred_element_type=jnp.float32)
          + b1)
    h1 = jnp.maximum(h1, 0.0)

    # fc2: cast back to MXU input dtype, accumulate in f32, ReLU in f32.
    h2 = jnp.dot(h1.astype(w2.dtype), w2, preferred_element_type=jnp.float32) + b2
    h2 = jnp.maximum(h2, 0.0)

    # fc3 computed transposed: (1,16) contracted with (TILE_B,16) -> (1, TILE_B).
    # This makes the output tile lane-dense (batch on the lane axis).
    q_t = lax.dot_general(
        w3t, h2.astype(w3t.dtype),
        dimension_numbers=(((1,), (1,)), ((), ())),
        preferred_element_type=jnp.float32) + b3

    o_ref[...] = q_t.astype(o_ref.dtype)


def critic_forward(state, action, params, *, compute_dtype=jnp.float32,
                   tile_b=512):
    """state: (B, state_dim), action: (B, action_dim) -> q: (B, 1) float32."""
    w1, b1, w2, b2, w3, b3 = params
    B, sd = state.shape
    ad = action.shape[1]

    # Batch tile: multiple of 128 so the transposed (1, TILE_B) output tile is
    # lane-dense; clamp for tiny demo batches. Pad batch to a tile multiple.
    tile_b = min(tile_b, _round_up(B, 128))
    b_pad = _round_up(B, tile_b)
    if b_pad != B:
        state = jnp.pad(state, ((0, b_pad - B), (0, 0)))
        action = jnp.pad(action, ((0, b_pad - B), (0, 0)))

    # MXU-input dtype (bf16 halves HBM read traffic on v6e/v7x).
    # Biases and all accumulation stay in f32.
    state = state.astype(compute_dtype)
    action = action.astype(compute_dtype)
    w1s = w1[:sd].astype(compute_dtype)   # concat folded into a split fc1
    w1a = w1[sd:].astype(compute_dtype)
    w2c = w2.astype(compute_dtype)
    w3t = w3.T.astype(compute_dtype)      # (1, 16): final layer transposed
    b1f = b1.astype(jnp.float32)
    b2f = b2.astype(jnp.float32)
    b3f = b3.astype(jnp.float32)

    n_tiles = b_pad // tile_b

    def resident(arr):   # whole array, same block every step -> stays in VMEM
        return pl.BlockSpec(arr.shape, lambda i: (0,) * arr.ndim)

    q_t = pl.pallas_call(
        critic_kernel,
        out_shape=jax.ShapeDtypeStruct((1, b_pad), jnp.float32),
        grid=(n_tiles,),
        in_specs=[
            pl.BlockSpec((tile_b, sd), lambda i: (i, 0)),
            pl.BlockSpec((tile_b, ad), lambda i: (i, 0)),
            resident(w1s), resident(w1a), resident(b1f),
            resident(w2c), resident(b2f),
            resident(w3t), resident(b3f),
        ],
        out_specs=pl.BlockSpec((1, tile_b), lambda i: (0, i)),
        compiler_params=pltpu.CompilerParams(
            dimension_semantics=("parallel",)),
    )(state, action, w1s, w1a, b1f, w2c, b2f, w3t, b3f)

    # (1, b_pad) lane-dense output -> (B, 1) like the torch module.
    return q_t[0, :B][:, None]


def init_params(state_dim, action_dim, key):
    # Deterministic synthetic init (shapes match the nn.Linear layers; weights
    # stored (in_features, out_features) so y = x @ W + b).
    k1, k2, k3, k4, k5, k6 = jax.random.split(key, 6)
    in_dim = state_dim + action_dim
    w1 = jax.random.normal(k1, (in_dim, 16), jnp.float32) * 0.1
    b1 = jax.random.normal(k2, (1, 16), jnp.float32) * 0.1
    w2 = jax.random.normal(k3, (16, 16), jnp.float32) * 0.1
    b2 = jax.random.normal(k4, (1, 16), jnp.float32) * 0.1
    w3 = jax.random.normal(k5, (16, 1), jnp.float32) * 0.1
    b3 = jax.random.normal(k6, (1, 1), jnp.float32) * 0.1
    return (w1, b1, w2, b2, w3, b3)


def critic_reference(state, action, params):
    w1, b1, w2, b2, w3, b3 = params
    x = jnp.concatenate([state, action], axis=1)
    h1 = jnp.maximum(x @ w1 + b1, 0.0)
    h2 = jnp.maximum(h1 @ w2 + b2, 0.0)
    return h2 @ w3 + b3


if __name__ == "__main__":
    batch, state_dim, action_dim = 2, 4, 4
    key = jax.random.PRNGKey(0)
    ks, ka, kp = jax.random.split(key, 3)

    state = jax.random.normal(ks, (batch, state_dim), jnp.float32)
    action = jax.random.normal(ka, (batch, action_dim), jnp.float32)
    params = init_params(state_dim, action_dim, kp)

    q_ref = critic_reference(state, action, params)

    # f32 path (tight check; small slack for TPU default matmul precision).
    q_f32 = jax.block_until_ready(
        critic_forward(state, action, params, compute_dtype=jnp.float32))
    assert q_f32.shape == (batch, 1)
    assert jnp.allclose(q_f32, q_ref, atol=1e-4, rtol=1e-4)

    # bf16 MXU-input path (HBM-bandwidth optimization for v6e/v7x), f32 accumulate.
    q_bf16 = jax.block_until_ready(
        critic_forward(state, action, params, compute_dtype=jnp.bfloat16))
    assert q_bf16.shape == (batch, 1)
    assert jnp.allclose(q_bf16, q_ref, atol=5e-2, rtol=5e-2)

    print("KERNEL_OK")
</pallas_src>

<mosaic_0001>
module attributes {stable_mosaic.version = 11 : i64} {
  func.func @critic_kernel(%arg0: i32, %arg1: memref<128x4xf32, #tpu.memory_space<vmem>>, %arg2: memref<128x4xf32, #tpu.memory_space<vmem>>, %arg3: memref<4x16xf32, #tpu.memory_space<vmem>>, %arg4: memref<4x16xf32, #tpu.memory_space<vmem>>, %arg5: memref<1x16xf32, #tpu.memory_space<vmem>>, %arg6: memref<16x16xf32, #tpu.memory_space<vmem>>, %arg7: memref<1x16xf32, #tpu.memory_space<vmem>>, %arg8: memref<1x16xf32, #tpu.memory_space<vmem>>, %arg9: memref<1x1xf32, #tpu.memory_space<vmem>>, %arg10: memref<1x128xf32, #tpu.memory_space<vmem>>) attributes {dimension_semantics = [#tpu.dimension_semantics<parallel>], iteration_bounds = array<i64: 1>, scalar_prefetch = 0 : i64, scratch_operands = 0 : i64, tpu.core_type = #tpu.core_type<tc>, window_params = [{transform_indices = @transform_0, window_bounds = array<i64: 128, 4>}, {transform_indices = @transform_1, window_bounds = array<i64: 128, 4>}, {pipeline_mode = #tpu.pipeline_mode<synchronous>, transform_indices = @transform_2, window_bounds = array<i64: 4, 16>}, {pipeline_mode = #tpu.pipeline_mode<synchronous>, transform_indices = @transform_3, window_bounds = array<i64: 4, 16>}, {pipeline_mode = #tpu.pipeline_mode<synchronous>, transform_indices = @transform_4, window_bounds = array<i64: 1, 16>}, {pipeline_mode = #tpu.pipeline_mode<synchronous>, transform_indices = @transform_5, window_bounds = array<i64: 16, 16>}, {pipeline_mode = #tpu.pipeline_mode<synchronous>, transform_indices = @transform_6, window_bounds = array<i64: 1, 16>}, {pipeline_mode = #tpu.pipeline_mode<synchronous>, transform_indices = @transform_7, window_bounds = array<i64: 1, 16>}, {pipeline_mode = #tpu.pipeline_mode<synchronous>, transform_indices = @transform_8, window_bounds = array<i64: 1, 1>}, {transform_indices = @transform_9, window_bounds = array<i64: 1, 128>}]} {
    %c0 = arith.constant 0 : index
    %c0_0 = arith.constant 0 : index
    %0 = vector.load %arg3[%c0, %c0_0] : memref<4x16xf32, #tpu.memory_space<vmem>>, vector<4x16xf32>
    %c0_1 = arith.constant 0 : index
    %c0_2 = arith.constant 0 : index
    %1 = vector.load %arg4[%c0_1, %c0_2] : memref<4x16xf32, #tpu.memory_space<vmem>>, vector<4x16xf32>
    %c0_3 = arith.constant 0 : index
    %c0_4 = arith.constant 0 : index
    %2 = vector.load %arg5[%c0_3, %c0_4] : memref<1x16xf32, #tpu.memory_space<vmem>>, vector<1x16xf32>
    %c0_5 = arith.constant 0 : index
    %c0_6 = arith.constant 0 : index
    %3 = vector.load %arg6[%c0_5, %c0_6] : memref<16x16xf32, #tpu.memory_space<vmem>>, vector<16x16xf32>
    %c0_7 = arith.constant 0 : index
    %c0_8 = arith.constant 0 : index
    %4 = vector.load %arg7[%c0_7, %c0_8] : memref<1x16xf32, #tpu.memory_space<vmem>>, vector<1x16xf32>
    %c0_9 = arith.constant 0 : index
    %c0_10 = arith.constant 0 : index
    %5 = vector.load %arg8[%c0_9, %c0_10] : memref<1x16xf32, #tpu.memory_space<vmem>>, vector<1x16xf32>
    %c0_11 = arith.constant 0 : index
    %c0_12 = arith.constant 0 : index
    %6 = vector.load %arg9[%c0_11, %c0_12] : memref<1x1xf32, #tpu.memory_space<vmem>>, vector<1x1xf32>
    %c0_13 = arith.constant 0 : index
    %c0_14 = arith.constant 0 : index
    %7 = vector.load %arg1[%c0_13, %c0_14] : memref<128x4xf32, #tpu.memory_space<vmem>>, vector<128x4xf32>
    %c0_15 = arith.constant 0 : index
    %c0_16 = arith.constant 0 : index
    %8 = vector.load %arg2[%c0_15, %c0_16] : memref<128x4xf32, #tpu.memory_space<vmem>>, vector<128x4xf32>
    %cst = arith.constant dense<0.000000e+00> : vector<128x16xf32>
    %9 = tpu.matmul %7, %0, %cst {dimension_numbers = #tpu.dot_dimension_numbers<[1], [0], [0], [1], [0, 0, 1, 1], [], []>} : vector<128x4xf32>, vector<4x16xf32>, vector<128x16xf32> -> vector<128x16xf32>
    %cst_17 = arith.constant dense<0.000000e+00> : vector<128x16xf32>
    %10 = tpu.matmul %8, %1, %cst_17 {dimension_numbers = #tpu.dot_dimension_numbers<[1], [0], [0], [1], [0, 0, 1, 1], [], []>} : vector<128x4xf32>, vector<4x16xf32>, vector<128x16xf32> -> vector<128x16xf32>
    %11 = arith.addf %9, %10 : vector<128x16xf32>
    %12 = vector.broadcast %2 : vector<1x16xf32> to vector<128x16xf32>
    %13 = arith.addf %11, %12 : vector<128x16xf32>
    %cst_18 = arith.constant 0.000000e+00 : f32
    %14 = vector.broadcast %cst_18 : f32 to vector<128x16xf32>
    %15 = arith.maximumf %13, %14 : vector<128x16xf32>
    %cst_19 = arith.constant dense<0.000000e+00> : vector<128x16xf32>
    %16 = tpu.matmul %15, %3, %cst_19 {dimension_numbers = #tpu.dot_dimension_numbers<[1], [0], [0], [1], [0, 0, 1, 1], [], []>} : vector<128x16xf32>, vector<16x16xf32>, vector<128x16xf32> -> vector<128x16xf32>
    %17 = vector.broadcast %4 : vector<1x16xf32> to vector<128x16xf32>
    %18 = arith.addf %16, %17 : vector<128x16xf32>
    %cst_20 = arith.constant 0.000000e+00 : f32
    %19 = vector.broadcast %cst_20 : f32 to vector<128x16xf32>
    %20 = arith.maximumf %18, %19 : vector<128x16xf32>
    %cst_21 = arith.constant dense<0.000000e+00> : vector<1x128xf32>
    %21 = tpu.matmul %5, %20, %cst_21 {dimension_numbers = #tpu.dot_dimension_numbers<[1], [1], [0], [0], [0, 0, 1, 0], [], []>} : vector<1x16xf32>, vector<128x16xf32>, vector<1x128xf32> -> vector<1x128xf32>
    %22 = vector.broadcast %6 : vector<1x1xf32> to vector<1x128xf32>
    %23 = arith.addf %21, %22 : vector<1x128xf32>
    %c0_22 = arith.constant 0 : index
    %c0_23 = arith.constant 0 : index
    %24 = vector.load %arg10[%c0_22, %c0_23] : memref<1x128xf32, #tpu.memory_space<vmem>>, vector<1x128xf32>
    tpu.vector_store %arg10[%c0_22, %c0_23], %23 {strides = array<i32>} : memref<1x128xf32, #tpu.memory_space<vmem>>, vector<1x128xf32>,
    return
  }
  func.func @transform_0(%arg0: i32) -> (i32, i32) {
    %c0_i32 = arith.constant 0 : i32
    %c0_i32_0 = arith.constant 0 : i32
    return %arg0, %c0_i32 : i32, i32
  }
  func.func @transform_1(%arg0: i32) -> (i32, i32) {
    %c0_i32 = arith.constant 0 : i32
    %c0_i32_0 = arith.constant 0 : i32
    return %arg0, %c0_i32 : i32, i32
  }
  func.func @transform_2(%arg0: i32) -> (i32, i32) {
    %c0_i32 = arith.constant 0 : i32
    %c0_i32_0 = arith.constant 0 : i32
    %c0_i32_1 = arith.constant 0 : i32
    return %c0_i32, %c0_i32_0 : i32, i32
  }
  func.func @transform_3(%arg0: i32) -> (i32, i32) {
    %c0_i32 = arith.constant 0 : i32
    %c0_i32_0 = arith.constant 0 : i32
    %c0_i32_1 = arith.constant 0 : i32
    return %c0_i32, %c0_i32_0 : i32, i32
  }
  func.func @transform_4(%arg0: i32) -> (i32, i32) {
    %c0_i32 = arith.constant 0 : i32
    %c0_i32_0 = arith.constant 0 : i32
    %c0_i32_1 = arith.constant 0 : i32
    return %c0_i32, %c0_i32_0 : i32, i32
  }
  func.func @transform_5(%arg0: i32) -> (i32, i32) {
    %c0_i32 = arith.constant 0 : i32
    %c0_i32_0 = arith.constant 0 : i32
    %c0_i32_1 = arith.constant 0 : i32
    return %c0_i32, %c0_i32_0 : i32, i32
  }
  func.func @transform_6(%arg0: i32) -> (i32, i32) {
    %c0_i32 = arith.constant 0 : i32
    %c0_i32_0 = arith.constant 0 : i32
    %c0_i32_1 = arith.constant 0 : i32
    return %c0_i32, %c0_i32_0 : i32, i32
  }
  func.func @transform_7(%arg0: i32) -> (i32, i32) {
    %c0_i32 = arith.constant 0 : i32
    %c0_i32_0 = arith.constant 0 : i32
    %c0_i32_1 = arith.constant 0 : i32
    return %c0_i32, %c0_i32_0 : i32, i32
  }
  func.func @transform_8(%arg0: i32) -> (i32, i32) {
    %c0_i32 = arith.constant 0 : i32
    %c0_i32_0 = arith.constant 0 : i32
    %c0_i32_1 = arith.constant 0 : i32
    return %c0_i32, %c0_i32_0 : i32, i32
  }
  func.func @transform_9(%arg0: i32) -> (i32, i32) {
    %c0_i32 = arith.constant 0 : i32
    %c0_i32_0 = arith.constant 0 : i32
    return %c0_i32, %arg0 : i32, i32
  }
}

</mosaic_0001>

<llo_original>
// kernel: tpu_custom_call.1
$region0: #{tpu_custom_call.1}
  #allocation0 [shape = 'u32[]', space=smem, size = 0x4, offset = 0x4, fixed_abs, tag = 'smem constant byte address 0x4 - core index']
  #allocation1 [shape = 'u32[72,128]{1,0:T(1,128)}', space=vmem, size = 0x9000, scoped, tag = 'internal scratch']
  #allocation2 [shape = 'f32[1,1]{1,0:T(1,128)S(1)}', space=vmem, size = 0x200, scoped, tag = 'scoped memory for tpu_custom_call.1']
  %s0 = inlined_call_operand.vmem [shape: f32[128,4], index: 0, kind: input, shape index: {}]
  %s1 = inlined_call_operand.vmem [shape: f32[128,4], index: 1, kind: input, shape index: {}]
  %s2 = inlined_call_operand.vmem [shape: f32[4,16], index: 2, kind: input, shape index: {}]
  %s3 = inlined_call_operand.vmem [shape: f32[4,16], index: 3, kind: input, shape index: {}]
  %s4 = inlined_call_operand.vmem [shape: f32[1,16], index: 4, kind: input, shape index: {}]
  %s5 = inlined_call_operand.vmem [shape: f32[16,16], index: 5, kind: input, shape index: {}]
  %s6 = inlined_call_operand.vmem [shape: f32[1,16], index: 6, kind: input, shape index: {}]
  %s7 = inlined_call_operand.vmem [shape: f32[1,16], index: 7, kind: input, shape index: {}]
  %s8 = inlined_call_operand.<no memory space> [shape: f32[1,1], index: 8, kind: input, shape index: {}]
  %s9 = inlined_call_operand.hbm [shape: f32[1,128], index: 9, kind: output, shape index: {}]
  %s10 = sld [smem:[#allocation0]]
  $region46: #{tpu_custom_call.1} parent=0
    _
  %s12 = ssub.s32 1, %s10
  %s13 = scalar_select 0, %s12, %s10
  %v14 = vstv %s8
  %15 = vst [vmem:[#allocation2] sm:$0x1] %v14
  $region1: #{tpu_custom_call.1} parent=0
    #allocation3 [shape = 'u8[512]{0}', space=vmem, size = 0x400, scoped, tag = 'output window, operand 0, single buffered']
    #allocation4 [shape = 's32[1]{0}', space=sflag, size = 0x4, scoped, tag = 'scoped memory for tpu_custom_call.1']
    %16 = vsyncpa [#allocation4], 0
    // Predicated region
    $region2: #{tpu_custom_call.1} parent=1 // pred_check
      _
    $region3: #{tpu_custom_call.1} parent=1 // pred_check_branch
      %18 = sbr.rel (0) target = $region5
    $region4: #{tpu_custom_call.1} parent=1 // pred_region
      _
    $region5: #{tpu_custom_call.1} parent=1 // pred_fallthru
      _
    // Predicated region
    $region6: #{tpu_custom_call.1} parent=1 // pred_check
      _
    $region7: #{tpu_custom_call.1} parent=1 // pred_check_branch
      %20 = sbr.rel (0) target = $region9
    $region8: #{tpu_custom_call.1} parent=1 // pred_region
      _
    $region9: #{tpu_custom_call.1} parent=1 // pred_fallthru
      _
    // Predicated region
    $region10: #{tpu_custom_call.1} parent=1 // pred_check
      _
    $region11: #{tpu_custom_call.1} parent=1 // pred_check_branch
      %22 = sbr.rel (0) target = $region13
    $region12: #{tpu_custom_call.1} parent=1 // pred_region
      _
    $region13: #{tpu_custom_call.1} parent=1 // pred_fallthru
      _
    // Predicated region
    $region14: #{tpu_custom_call.1} parent=1 // pred_check
      _
    $region15: #{tpu_custom_call.1} parent=1 // pred_check_branch
      %24 = sbr.rel (0) target = $region17
    $region16: #{tpu_custom_call.1} parent=1 // pred_region
      _
    $region17: #{tpu_custom_call.1} parent=1 // pred_fallthru
      _
    // Predicated region
    $region18: #{tpu_custom_call.1} parent=1 // pred_check
      _
    $region19: #{tpu_custom_call.1} parent=1 // pred_check_branch
      %26 = sbr.rel (0) target = $region21
    $region20: #{tpu_custom_call.1} parent=1 // pred_region
      _
    $region21: #{tpu_custom_call.1} parent=1 // pred_fallthru
      _
    // Predicated region
    $region22: #{tpu_custom_call.1} parent=1 // pred_check
      _
    $region23: #{tpu_custom_call.1} parent=1 // pred_check_branch
      %28 = sbr.rel (0) target = $region25
    $region24: #{tpu_custom_call.1} parent=1 // pred_region
      _
    $region25: #{tpu_custom_call.1} parent=1 // pred_fallthru
      _
    // Predicated region
    $region26: #{tpu_custom_call.1} parent=1 // pred_check
      _
    $region27: #{tpu_custom_call.1} parent=1 // pred_check_branch
      %30 = sbr.rel (0) target = $region29
    $region28: #{tpu_custom_call.1} parent=1 // pred_region
      _
    $region29: #{tpu_custom_call.1} parent=1 // pred_fallthru
      _
    // Predicated region
    $region30: #{tpu_custom_call.1} parent=1 // pred_check
      _
    $region31: #{tpu_custom_call.1} parent=1 // pred_check_branch
      %32 = sbr.rel (0) target = $region33
    $region32: #{tpu_custom_call.1} parent=1 // pred_region
      _
    $region33: #{tpu_custom_call.1} parent=1 // pred_fallthru
      _
    // Predicated region
    $region34: #{tpu_custom_call.1} parent=1 // pred_check
      _
    $region35: #{tpu_custom_call.1} parent=1 // pred_check_branch
      %34 = sbr.rel (0) target = $region37
    $region36: #{tpu_custom_call.1} parent=1 // pred_region
      _
    $region37: #{tpu_custom_call.1} parent=1 // pred_fallthru
      _
    %v35 = vld [vmem:[%s2] sm:$0xf]
    %v36 = vld [vmem:[%s3] sm:$0xf]
    %v37 = vld [vmem:[%s4] sm:$0x1]
    %v38 = vld [vmem:[%s5] sm:$0xff]
    %v39 = vld [vmem:[%s5 + $0x8] sm:$0xff]
    %v40 = vld [vmem:[%s6] sm:$0x1]
    %v41 = vld [vmem:[%s7] sm:$0x1]
    %v42 = vld [vmem:[#allocation2] sm:$0x1]
    %v43 = vld [vmem:[%s0] sm:$0xff]
    %v44 = vld [vmem:[%s0 + $0x8] sm:$0xff]
    %v45 = vld [vmem:[%s0 + $0x10] sm:$0xff]
    %v46 = vld [vmem:[%s0 + $0x18] sm:$0xff]
    %v47 = vld [vmem:[%s0 + $0x20] sm:$0xff]
    %v48 = vld [vmem:[%s0 + $0x28] sm:$0xff]
    %v49 = vld [vmem:[%s0 + $0x30] sm:$0xff]
    %v50 = vld [vmem:[%s0 + $0x38] sm:$0xff]
    %v51 = vld [vmem:[%s0 + $0x40] sm:$0xff]
    %v52 = vld [vmem:[%s0 + $0x48] sm:$0xff]
    %v53 = vld [vmem:[%s0 + $0x50] sm:$0xff]
    %v54 = vld [vmem:[%s0 + $0x58] sm:$0xff]
    %v55 = vld [vmem:[%s0 + $0x60] sm:$0xff]
    %v56 = vld [vmem:[%s0 + $0x68] sm:$0xff]
    %v57 = vld [vmem:[%s0 + $0x70] sm:$0xff]
    %v58 = vld [vmem:[%s0 + $0x78] sm:$0xff]
    %v59 = vld [vmem:[%s1] sm:$0xff]
    %v60 = vld [vmem:[%s1 + $0x8] sm:$0xff]
    %v61 = vld [vmem:[%s1 + $0x10] sm:$0xff]
    %v62 = vld [vmem:[%s1 + $0x18] sm:$0xff]
    %v63 = vld [vmem:[%s1 + $0x20] sm:$0xff]
    %v64 = vld [vmem:[%s1 + $0x28] sm:$0xff]
    %v65 = vld [vmem:[%s1 + $0x30] sm:$0xff]
    %v66 = vld [vmem:[%s1 + $0x38] sm:$0xff]
    %v67 = vld [vmem:[%s1 + $0x40] sm:$0xff]
    %v68 = vld [vmem:[%s1 + $0x48] sm:$0xff]
    %v69 = vld [vmem:[%s1 + $0x50] sm:$0xff]
    %v70 = vld [vmem:[%s1 + $0x58] sm:$0xff]
    %v71 = vld [vmem:[%s1 + $0x60] sm:$0xff]
    %v72 = vld [vmem:[%s1 + $0x68] sm:$0xff]
    %v73 = vld [vmem:[%s1 + $0x70] sm:$0xff]
    %v74 = vld [vmem:[%s1 + $0x78] sm:$0xff]
    %vm75 = vcmask 31744
    %v77 = vsel %vm75, %v59, 0
    %v80 = vsel %vm75, %v60, 0
    %v83 = vsel %vm75, %v61, 0
    %v86 = vsel %vm75, %v62, 0
    %v89 = vsel %vm75, %v63, 0
    %v92 = vsel %vm75, %v64, 0
    %v95 = vsel %vm75, %v65, 0
    %v98 = vsel %vm75, %v66, 0
    %v101 = vsel %vm75, %v67, 0
    %v104 = vsel %vm75, %v68, 0
    %v107 = vsel %vm75, %v69, 0
    %v110 = vsel %vm75, %v70, 0
    %v113 = vsel %vm75, %v71, 0
    %v116 = vsel %vm75, %v72, 0
    %v119 = vsel %vm75, %v73, 0
    %v122 = vsel %vm75, %v74, 0
    %vm124 = vcmask 1043456
    %v126 = vsel %vm124, %v36, 0
    %128 = vmatpush.msra.mxu0 0.0
    %129 = vmatpush.msra.mxu0 0.0
    %130 = vmatpush.msra.mxu0 0.0
    %131 = vmatpush.msra.mxu0 0.0
    %132 = vmatpush.msra.mxu0 0.0
    %133 = vmatpush.msra.mxu0 0.0
    %134 = vmatpush.msra.mxu0 0.0
    %135 = vmatpush.msra.mxu0 0.0
    %136 = vmatpush.msra.mxu0 0.0
    %137 = vmatpush.msra.mxu0 0.0
    %138 = vmatpush.msra.mxu0 0.0
    %139 = vmatpush.msra.mxu0 0.0
    %140 = vmatpush.msra.mxu0 0.0
    %141 = vmatpush.msra.mxu0 0.0
    %142 = vmatpush.msra.mxu0 0.0
    %143 = vmatpush.msra.mxu0 %v126
    %144 = vmatmul.f32.gmra.mxu0 %v77
    %v145 = vpop.f32.mrf.mxu0
    %v146 = vadd.f32 0.0, %v145
    %147 = vmatmul.f32.gmra.mxu0 %v80
    %v148 = vpop.f32.mrf.mxu0
    %v149 = vadd.f32 0.0, %v148
    %150 = vmatmul.f32.gmra.mxu0 %v83
    %v151 = vpop.f32.mrf.mxu0
    %v152 = vadd.f32 0.0, %v151
    %153 = vmatmul.f32.gmra.mxu0 %v86
    %v154 = vpop.f32.mrf.mxu0
    %v155 = vadd.f32 0.0, %v154
    %156 = vmatmul.f32.gmra.mxu0 %v89
    %v157 = vpop.f32.mrf.mxu0
    %v158 = vadd.f32 0.0, %v157
    %159 = vmatmul.f32.gmra.mxu0 %v92
    %v160 = vpop.f32.mrf.mxu0
    %v161 = vadd.f32 0.0, %v160
    %162 = vmatmul.f32.gmra.mxu0 %v95
    %v163 = vpop.f32.mrf.mxu0
    %v164 = vadd.f32 0.0, %v163
    %165 = vmatmul.f32.gmra.mxu0 %v98
    %v166 = vpop.f32.mrf.mxu0
    %v167 = vadd.f32 0.0, %v166
    %168 = vmatmul.f32.gmra.mxu0 %v101
    %v169 = vpop.f32.mrf.mxu0
    %v170 = vadd.f32 0.0, %v169
    %171 = vmatmul.f32.gmra.mxu0 %v104
    %v172 = vpop.f32.mrf.mxu0
    %v173 = vadd.f32 0.0, %v172
    %174 = vmatmul.f32.gmra.mxu0 %v107
    %v175 = vpop.f32.mrf.mxu0
    %v176 = vadd.f32 0.0, %v175
    %177 = vmatmul.f32.gmra.mxu0 %v110
    %v178 = vpop.f32.mrf.mxu0
    %v179 = vadd.f32 0.0, %v178
    %180 = vmatmul.f32.gmra.mxu0 %v113
    %v181 = vpop.f32.mrf.mxu0
    %v182 = vadd.f32 0.0, %v181
    %183 = vmatmul.f32.gmra.mxu0 %v116
    %v184 = vpop.f32.mrf.mxu0
    %v185 = vadd.f32 0.0, %v184
    %186 = vmatmul.f32.gmra.mxu0 %v119
    %v187 = vpop.f32.mrf.mxu0
    %v188 = vadd.f32 0.0, %v187
    %189 = vmatmul.f32.gmra.mxu0 %v122
    %v190 = vpop.f32.mrf.mxu0
    %v191 = vadd.f32 0.0, %v190
    %192 = vdwg.mxu0
    %v194 = vsel %vm75, %v43, 0
    %v197 = vsel %vm75, %v44, 0
    %v200 = vsel %vm75, %v45, 0
    %v203 = vsel %vm75, %v46, 0
    %v206 = vsel %vm75, %v47, 0
    %v209 = vsel %vm75, %v48, 0
    %v212 = vsel %vm75, %v49, 0
    %v215 = vsel %vm75, %v50, 0
    %v218 = vsel %vm75, %v51, 0
    %v221 = vsel %vm75, %v52, 0
    %v224 = vsel %vm75, %v53, 0
    %v227 = vsel %vm75, %v54, 0
    %v230 = vsel %vm75, %v55, 0
    %v233 = vsel %vm75, %v56, 0
    %v236 = vsel %vm75, %v57, 0
    %v239 = vsel %vm75, %v58, 0
    %v242 = vsel %vm124, %v35, 0
    %244 = vmatpush.msra.mxu0 0.0
    %245 = vmatpush.msra.mxu0 0.0
    %246 = vmatpush.msra.mxu0 0.0
    %247 = vmatpush.msra.mxu0 0.0
    %248 = vmatpush.msra.mxu0 0.0
    %249 = vmatpush.msra.mxu0 0.0
    %250 = vmatpush.msra.mxu0 0.0
    %251 = vmatpush.msra.mxu0 0.0
    %252 = vmatpush.msra.mxu0 0.0
    %253 = vmatpush.msra.mxu0 0.0
    %254 = vmatpush.msra.mxu0 0.0
    %255 = vmatpush.msra.mxu0 0.0
    %256 = vmatpush.msra.mxu0 0.0
    %257 = vmatpush.msra.mxu0 0.0
    %258 = vmatpush.msra.mxu0 0.0
    %259 = vmatpush.msra.mxu0 %v242
    %260 = vmatmul.f32.gmra.mxu0 %v194
    %v261 = vpop.f32.mrf.mxu0
    %v262 = vadd.f32 %v146, %v261
    %263 = vmatmul.f32.gmra.mxu0 %v197
    %v264 = vpop.f32.mrf.mxu0
    %v265 = vadd.f32 %v149, %v264
    %266 = vmatmul.f32.gmra.mxu0 %v200
    %v267 = vpop.f32.mrf.mxu0
    %v268 = vadd.f32 %v152, %v267
    %269 = vmatmul.f32.gmra.mxu0 %v203
    %v270 = vpop.f32.mrf.mxu0
    %v271 = vadd.f32 %v155, %v270
    %272 = vmatmul.f32.gmra.mxu0 %v206
    %v273 = vpop.f32.mrf.mxu0
    %v274 = vadd.f32 %v158, %v273
    %275 = vmatmul.f32.gmra.mxu0 %v209
    %v276 = vpop.f32.mrf.mxu0
    %v277 = vadd.f32 %v161, %v276
    %278 = vmatmul.f32.gmra.mxu0 %v212
    %v279 = vpop.f32.mrf.mxu0
    %v280 = vadd.f32 %v164, %v279
    %281 = vmatmul.f32.gmra.mxu0 %v215
    %v282 = vpop.f32.mrf.mxu0
    %v283 = vadd.f32 %v167, %v282
    %284 = vmatmul.f32.gmra.mxu0 %v218
    %v285 = vpop.f32.mrf.mxu0
    %v286 = vadd.f32 %v170, %v285
    %287 = vmatmul.f32.gmra.mxu0 %v221
    %v288 = vpop.f32.mrf.mxu0
    %v289 = vadd.f32 %v173, %v288
    %290 = vmatmul.f32.gmra.mxu0 %v224
    %v291 = vpop.f32.mrf.mxu0
    %v292 = vadd.f32 %v176, %v291
    %293 = vmatmul.f32.gmra.mxu0 %v227
    %v294 = vpop.f32.mrf.mxu0
    %v295 = vadd.f32 %v179, %v294
    %296 = vmatmul.f32.gmra.mxu0 %v230
    %v297 = vpop.f32.mrf.mxu0
    %v298 = vadd.f32 %v182, %v297
    %299 = vmatmul.f32.gmra.mxu0 %v233
    %v300 = vpop.f32.mrf.mxu0
    %v301 = vadd.f32 %v185, %v300
    %302 = vmatmul.f32.gmra.mxu0 %v236
    %v303 = vpop.f32.mrf.mxu0
    %v304 = vadd.f32 %v188, %v303
    %305 = vmatmul.f32.gmra.mxu0 %v239
    %v306 = vpop.f32.mrf.mxu0
    %v307 = vadd.f32 %v191, %v306
    %308 = vdwg.mxu0
    %v310 = vperm.slane %v37, 0
    %v312 = vadd.f32 %v262, %v310
    %v313 = vadd.f32 %v265, %v310
    %v314 = vadd.f32 %v268, %v310
    %v315 = vadd.f32 %v271, %v310
    %v316 = vadd.f32 %v274, %v310
    %v317 = vadd.f32 %v277, %v310
    %v318 = vadd.f32 %v280, %v310
    %v319 = vadd.f32 %v283, %v310
    %v320 = vadd.f32 %v286, %v310
    %v321 = vadd.f32 %v289, %v310
    %v322 = vadd.f32 %v292, %v310
    %v323 = vadd.f32 %v295, %v310
    %v324 = vadd.f32 %v298, %v310
    %v325 = vadd.f32 %v301, %v310
    %v326 = vadd.f32 %v304, %v310
    %v327 = vadd.f32 %v307, %v310
    %v328 = vmax.f32 %v312, 0.0
    %v329 = vmax.f32 %v313, 0.0
    %v330 = vmax.f32 %v314, 0.0
    %v331 = vmax.f32 %v315, 0.0
    %v332 = vmax.f32 %v316, 0.0
    %v333 = vmax.f32 %v317, 0.0
    %v334 = vmax.f32 %v318, 0.0
    %v335 = vmax.f32 %v319, 0.0
    %v336 = vmax.f32 %v320, 0.0
    %v337 = vmax.f32 %v321, 0.0
    %v338 = vmax.f32 %v322, 0.0
    %v339 = vmax.f32 %v323, 0.0
    %v340 = vmax.f32 %v324, 0.0
    %v341 = vmax.f32 %v325, 0.0
    %v342 = vmax.f32 %v326, 0.0
    %v343 = vmax.f32 %v327, 0.0
    %v345 = vperm.slane %v40, 0
    %vm347 = vcmask 130048
    %v349 = vsel %vm347, %v328, 0
    %v352 = vsel %vm347, %v329, 0
    %v355 = vsel %vm347, %v330, 0
    %v358 = vsel %vm347, %v331, 0
    %v361 = vsel %vm347, %v332, 0
    %v364 = vsel %vm347, %v333, 0
    %v367 = vsel %vm347, %v334, 0
    %v370 = vsel %vm347, %v335, 0
    %v373 = vsel %vm347, %v336, 0
    %v376 = vsel %vm347, %v337, 0
    %v379 = vsel %vm347, %v338, 0
    %v382 = vsel %vm347, %v339, 0
    %v385 = vsel %vm347, %v340, 0
    %v388 = vsel %vm347, %v341, 0
    %v391 = vsel %vm347, %v342, 0
    %v394 = vsel %vm347, %v343, 0
    %396 = vmatpush.msra.mxu0 0.0
    %397 = vmatpush.msra.mxu0 0.0
    %398 = vmatpush.msra.mxu0 0.0
    %399 = vmatpush.msra.mxu0 0.0
    %400 = vmatpush.msra.mxu0 0.0
    %401 = vmatpush.msra.mxu0 0.0
    %402 = vmatpush.msra.mxu0 0.0
    %403 = vmatpush.msra.mxu0 0.0
    %404 = vmatpush.msra.mxu0 0.0
    %405 = vmatpush.msra.mxu0 0.0
    %406 = vmatpush.msra.mxu0 0.0
    %407 = vmatpush.msra.mxu0 0.0
    %408 = vmatpush.msra.mxu0 0.0
    %409 = vmatpush.msra.mxu0 0.0
    %410 = vmatpush.msra.mxu0 %v39
    %411 = vmatpush.msra.mxu0 %v38
    %412 = vmatmul.f32.gmra.mxu0 %v349
    %v413 = vpop.f32.mrf.mxu0
    %v414 = vadd.f32 %v345, %v413
    %415 = vmatmul.f32.gmra.mxu0 %v352
    %v416 = vpop.f32.mrf.mxu0
    %v417 = vadd.f32 %v345, %v416
    %418 = vmatmul.f32.gmra.mxu0 %v355
    %v419 = vpop.f32.mrf.mxu0
    %v420 = vadd.f32 %v345, %v419
    %421 = vmatmul.f32.gmra.mxu0 %v358
    %v422 = vpop.f32.mrf.mxu0
    %v423 = vadd.f32 %v345, %v422
    %424 = vmatmul.f32.gmra.mxu0 %v361
    %v425 = vpop.f32.mrf.mxu0
    %v426 = vadd.f32 %v345, %v425
    %427 = vmatmul.f32.gmra.mxu0 %v364
    %v428 = vpop.f32.mrf.mxu0
    %v429 = vadd.f32 %v345, %v428
    %430 = vmatmul.f32.gmra.mxu0 %v367
    %v431 = vpop.f32.mrf.mxu0
    %v432 = vadd.f32 %v345, %v431
    %433 = vmatmul.f32.gmra.mxu0 %v370
    %v434 = vpop.f32.mrf.mxu0
    %v435 = vadd.f32 %v345, %v434
    %436 = vmatmul.f32.gmra.mxu0 %v373
    %v437 = vpop.f32.mrf.mxu0
    %v438 = vadd.f32 %v345, %v437
    %439 = vmatmul.f32.gmra.mxu0 %v376
    %v440 = vpop.f32.mrf.mxu0
    %v441 = vadd.f32 %v345, %v440
    %442 = vmatmul.f32.gmra.mxu0 %v379
    %v443 = vpop.f32.mrf.mxu0
    %v444 = vadd.f32 %v345, %v443
    %445 = vmatmul.f32.gmra.mxu0 %v382
    %v446 = vpop.f32.mrf.mxu0
    %v447 = vadd.f32 %v345, %v446
    %448 = vmatmul.f32.gmra.mxu0 %v385
    %v449 = vpop.f32.mrf.mxu0
    %v450 = vadd.f32 %v345, %v449
    %451 = vmatmul.f32.gmra.mxu0 %v388
    %v452 = vpop.f32.mrf.mxu0
    %v453 = vadd.f32 %v345, %v452
    %454 = vmatmul.f32.gmra.mxu0 %v391
    %v455 = vpop.f32.mrf.mxu0
    %v456 = vadd.f32 %v345, %v455
    %457 = vmatmul.f32.gmra.mxu0 %v394
    %v458 = vpop.f32.mrf.mxu0
    %v459 = vadd.f32 %v345, %v458
    %460 = vdwg.mxu0
    %v461 = vmax.f32 %v414, 0.0
    %v462 = vmax.f32 %v417, 0.0
    %v463 = vmax.f32 %v420, 0.0
    %v464 = vmax.f32 %v423, 0.0
    %v465 = vmax.f32 %v426, 0.0
    %v466 = vmax.f32 %v429, 0.0
    %v467 = vmax.f32 %v432, 0.0
    %v468 = vmax.f32 %v435, 0.0
    %v469 = vmax.f32 %v438, 0.0
    %v470 = vmax.f32 %v441, 0.0
    %v471 = vmax.f32 %v444, 0.0
    %v472 = vmax.f32 %v447, 0.0
    %v473 = vmax.f32 %v450, 0.0
    %v474 = vmax.f32 %v453, 0.0
    %v475 = vmax.f32 %v456, 0.0
    %v476 = vmax.f32 %v459, 0.0
    %478 = vset.pattern.permute.xlu0 0
    %479 = vperm.xlu0 %478, %v42
    %v480 = vpop.permute.xlu0 %479
    %v482 = vperm.slane %v480, 0
    %v484 = vsel %vm347, %v41, 0
    %v487 = vsel %vm347, %v461, 0
    %v490 = vsel %vm347, %v462, 0
    %v493 = vsel %vm347, %v463, 0
    %v496 = vsel %vm347, %v464, 0
    %v499 = vsel %vm347, %v465, 0
    %v502 = vsel %vm347, %v466, 0
    %v505 = vsel %vm347, %v467, 0
    %v508 = vsel %vm347, %v468, 0
    %v511 = vsel %vm347, %v469, 0
    %v514 = vsel %vm347, %v470, 0
    %v517 = vsel %vm347, %v471, 0
    %v520 = vsel %vm347, %v472, 0
    %v523 = vsel %vm347, %v473, 0
    %v526 = vsel %vm347, %v474, 0
    %v529 = vsel %vm347, %v475, 0
    %v532 = vsel %vm347, %v476, 0
    %534 = vmatpush.xpose.msra.mxu0 %v532
    %535 = vmatpush.xpose.msra.mxu0 %v529
    %536 = vmatpush.xpose.msra.mxu0 %v526
    %537 = vmatpush.xpose.msra.mxu0 %v523
    %538 = vmatpush.xpose.msra.mxu0 %v520
    %539 = vmatpush.xpose.msra.mxu0 %v517
    %540 = vmatpush.xpose.msra.mxu0 %v514
    %541 = vmatpush.xpose.msra.mxu0 %v511
    %542 = vmatpush.xpose.msra.mxu0 %v508
    %543 = vmatpush.xpose.msra.mxu0 %v505
    %544 = vmatpush.xpose.msra.mxu0 %v502
    %545 = vmatpush.xpose.msra.mxu0 %v499
    %546 = vmatpush.xpose.msra.mxu0 %v496
    %547 = vmatpush.xpose.msra.mxu0 %v493
    %548 = vmatpush.xpose.msra.mxu0 %v490
    %549 = vmatpush.xpose.msra.mxu0 %v487
    %550 = vmatmul.f32.gmra.mxu0 %v484
    %v551 = vpop.f32.mrf.mxu0
    %v552 = vadd.f32 %v482, %v551
    %553 = vdwg.mxu0
    %554 = vst [vmem:[#allocation3] sm:$0x1] %v552
    // Predicated region
    $region38: #{tpu_custom_call.1} parent=1 // pred_check
      _
    $region39: #{tpu_custom_call.1} parent=1 // pred_check_branch
      %556 = sbr.rel (0) target = $region41
    $region40: #{tpu_custom_call.1} parent=1 // pred_region
      %558 = vsyncadd [#allocation4], 0
      %s560 = sshll.u32 [#allocation3], 4
      %s561 = int_to_ptr.vmem [resolvable:$true] %s560
      %s562 = sshll.u32 %s9, 4
      %s563 = int_to_ptr.hbm [resolvable:$true] %s562
      %565 = dma.vmem_to_hbm [thread:$0]  %s561, 16, %s563, [#allocation4]
    $region41: #{tpu_custom_call.1} parent=1 // pred_fallthru
      _
    // Predicated region
    $region42: #{tpu_custom_call.1} parent=1 // pred_check
      _
    $region43: #{tpu_custom_call.1} parent=1 // pred_check_branch
      %567 = sbr.rel (0) target = $region45
    $region44: #{tpu_custom_call.1} parent=1 // pred_region
      %569 = dma.done [#allocation4], 16
    $region45: #{tpu_custom_call.1} parent=1 // pred_fallthru
      _
    %570 = vsyncpa [#allocation4], 1

</llo_original>
